<compile_context>
chip_gen: v6e
topology: v6e:2x2x1
jax: 0.10.0
libtpu: 0.0.40
codegen_flags: <defaults>
</compile_context>

<pallas_src>
import functools

import numpy as np

import jax
import jax.numpy as jnp
from jax.experimental import pallas as pl
from jax.experimental.pallas import tpu as pltpu


# ---------------------------------------------------------------------------
# Deterministic parameter construction (kornia-style Gaussian kernel), numpy
# so the band matrices are concrete constants at trace time.
# ---------------------------------------------------------------------------
def _gaussian_1d_np(window_size: int, sigma: float) -> np.ndarray:
    x = np.arange(window_size, dtype=np.float64) - window_size // 2
    if window_size % 2 == 0:
        x = x + 0.5
    g = np.exp(-(x ** 2) / (2.0 * sigma ** 2))
    return g / g.sum()


def _map_index(r: int, size: int, mode: str) -> int:
    """Map an out-of-range source index according to the padding mode."""
    if mode == "reflect":
        if size == 1:
            return 0
        period = 2 * (size - 1)
        r = r % period
        return period - r if r >= size else r
    if mode == "replicate":
        return min(max(r, 0), size - 1)
    if mode == "circular":
        return r % size
    raise ValueError(f"unsupported padding_mode {mode}")


def _band_matrix(size: int, taps: np.ndarray, pad: int, mode: str) -> np.ndarray:
    """(size, size) matrix M with out = M @ x equal to the 1D padded correlation.

    For mode == 'constant', taps falling outside the signal are dropped (the
    fill-value contribution is a separable rank-1 correction added by the
    wrapper when fill_value != 0).
    """
    m = np.zeros((size, size), dtype=np.float64)
    for out_i in range(size):
        for t, w in enumerate(taps):
            src = out_i + t - pad
            if mode == "constant":
                if 0 <= src < size:
                    m[out_i, src] += w
            else:
                m[out_i, _map_index(src, size, mode)] += w
    return m


def _ceil_div(a: int, b: int) -> int:
    return -(-a // b)


def _vmem_capacity_bytes() -> int:
    try:
        return int(pltpu.get_tpu_info().vmem_capacity_bytes)
    except Exception:
        return 64 * 1024 * 1024   # v7x per-TensorCore capacity: safe lower bound


# ---------------------------------------------------------------------------
# Pallas kernels.
# ---------------------------------------------------------------------------
def _kron_kernel(x_ref, m_ref, o_ref):
    # x_ref: (rows, HW), m_ref: (HW, HW), o_ref: (rows, HW).  One lane-dense
    # MXU matmul applies the full 2D blur + padding operator to `rows` planes.
    x = x_ref[...].astype(m_ref.dtype)
    o_ref[...] = jnp.dot(x, m_ref[...],
                         preferred_element_type=jnp.float32).astype(o_ref.dtype)


def _separable_kernel(x_ref, mh_ref, mw_ref, o_ref, *, cdt, fuse_w):
    # x_ref/o_ref: (B, H, W); mh_ref: (H, H) (left form); mw_ref: (W, W)
    # (already transposed: out = x @ mw).
    bsz, h, w = x_ref.shape
    mh = mh_ref[...]
    mw = mw_ref[...]
    if fuse_w:
        # W pass: one big (B*H, W) @ (W, W) matmul (fills the MXU width).
        xw = x_ref[...].astype(cdt).reshape(bsz * h, w)
        t = jnp.dot(xw, mw, preferred_element_type=jnp.float32)
        o_ref[...] = t.reshape(bsz, h, w).astype(o_ref.dtype)

        # H pass: per-plane matmul; fori_loop bounds live ranges (no static
        # unroll, no large persistent temporaries).  Reads back the first-pass
        # result from the output block (no extra VMEM scratch).
        def body(b, carry):
            o_ref[b] = jnp.dot(mh, o_ref[b].astype(cdt),
                               preferred_element_type=jnp.float32).astype(o_ref.dtype)
            return carry
    else:
        # H not a multiple of 8: avoid the (B,H,W)->(B*H,W) relayout and do
        # both passes per plane.
        def body(b, carry):
            t = jnp.dot(x_ref[b].astype(cdt), mw,
                        preferred_element_type=jnp.float32).astype(cdt)
            o_ref[b] = jnp.dot(mh, t,
                               preferred_element_type=jnp.float32).astype(o_ref.dtype)
            return carry

    jax.lax.fori_loop(0, bsz, body, 0)


# ---------------------------------------------------------------------------
# Module wrapper.
# ---------------------------------------------------------------------------
class GaussianBlur2d:
    """Pallas port of combustion.vision.filters.GaussianBlur2d."""

    _KRON_MAX_HW = 1024   # use the dense 2D operator path when H*W <= this

    def __init__(self, kernel_size, sigma, padding_mode: str = "reflect",
                 fill_value: float = 0.0, mxu_dtype=jnp.bfloat16):
        self.kernel_size = tuple(kernel_size)
        self.sigma = tuple(sigma)
        self.padding_mode = padding_mode
        self.fill_value = float(fill_value)
        self.mxu_dtype = mxu_dtype            # MXU operand dtype (f32 accumulate)
        kh, kw = self.kernel_size
        self._taps_h = _gaussian_1d_np(kh, float(self.sigma[0]))
        self._taps_w = _gaussian_1d_np(kw, float(self.sigma[1]))

    # --- block-size selection helpers --------------------------------------
    @staticmethod
    def _pick_batch(nc: int, target: int):
        """Plane batch for the separable path.

        No divisibility constraint on the leading block dim; prefer an exact
        divisor of nc (avoids the padding copy) and keep >= 2 grid steps so
        v7x can shard the parallel axis across its two TensorCores.
        """
        target = max(1, min(target, _ceil_div(nc, 2) if nc > 1 else 1))
        for b in range(target, max(1, target // 2) - 1, -1):
            if nc % b == 0:
                return b, nc
        return target, _ceil_div(nc, target) * target

    @staticmethod
    def _pick_rows(nc: int, target: int):
        """Rows per block for the kron path (leading block dim must be a
        multiple of 8 or equal to the padded array dim)."""
        if nc <= 8:
            return nc, nc
        steps = max(2, _ceil_div(nc, max(8, target)))   # >= 2 steps (megacore)
        rows = _ceil_div(_ceil_div(nc, steps), 8) * 8
        nc_pad = _ceil_div(nc, rows) * rows
        return rows, nc_pad

    # --- forward ------------------------------------------------------------
    def __call__(self, inputs: jnp.ndarray) -> jnp.ndarray:
        if inputs.ndim != 4:
            raise ValueError("expected NCHW input")
        N, C, H, W = inputs.shape
        kh, kw = self.kernel_size
        ph, pw = kh // 2, kw // 2
        mode = self.padding_mode
        if mode not in ("reflect", "replicate", "constant", "circular"):
            raise ValueError(f"unsupported padding_mode {mode}")

        cdt = self.mxu_dtype
        itemsize = int(jnp.dtype(inputs.dtype).itemsize)
        cds = int(jnp.dtype(cdt).itemsize)

        # Banded 1D blur matrices with the padding folded in (float64 numpy;
        # cast to the MXU dtype only when handed to the kernel).
        bh = _band_matrix(H, self._taps_h, ph, mode)      # (H, H): out = bh @ x
        bw = _band_matrix(W, self._taps_w, pw, mode)      # (W, W)

        NC = N * C
        x = inputs.reshape(NC, H, W)

        # --- per-generation VMEM budget (v5e/v6e 128 MiB, v7x 64 MiB) -------
        cap = _vmem_capacity_bytes()
        vmem_limit = int(min(cap, 128 * 2 ** 20) - (4 << 20))
        usable = vmem_limit - (12 << 20)      # headroom for compiler internals

        use_kron = (H * W) <= self._KRON_MAX_HW

        if use_kron:
            # ---- small planes: single lane-dense 2D-operator matmul --------
            HW = H * W
            op_bytes = 2 * HW * HW * cds                   # double-buffered op
            row_bytes = 4 * HW * itemsize                  # in(x2) + out(x2)
            target = max(8, (usable - op_bytes - (2 << 20)) // max(row_bytes, 1))
            target = int(min(target, 8192))
            rows, nc_pad = self._pick_rows(NC, target)

            x2 = x.reshape(NC, HW)
            if nc_pad != NC:
                x2 = jnp.pad(x2, ((0, nc_pad - NC), (0, 0)))
            # vec(out) = (Bh ⊗ Bw) vec(x)  =>  out_row = x_row @ kron(Bh,Bw)^T
            op = jnp.asarray(np.kron(bh, bw).T, dtype=cdt)          # (HW, HW)

            steps = nc_pad // rows
            cost = pl.CostEstimate(
                flops=2 * nc_pad * HW * HW, transcendentals=0,
                bytes_accessed=2 * nc_pad * HW * itemsize + HW * HW * cds)

            out2 = pl.pallas_call(
                _kron_kernel,
                out_shape=jax.ShapeDtypeStruct((nc_pad, HW), inputs.dtype),
                grid_spec=pltpu.PrefetchScalarGridSpec(
                    num_scalar_prefetch=0,
                    grid=(steps,),
                    in_specs=[
                        pl.BlockSpec((rows, HW), lambda i: (i, 0)),
                        # Operator: full-array block, constant index map ->
                        # fetched once, resident across all grid steps.
                        pl.BlockSpec((HW, HW), lambda i: (0, 0)),
                    ],
                    out_specs=pl.BlockSpec((rows, HW), lambda i: (i, 0)),
                ),
                compiler_params=pltpu.CompilerParams(
                    dimension_semantics=("parallel",),
                    vmem_limit_bytes=vmem_limit),
                cost_estimate=cost,
            )(x2, op)
            out = out2[:NC].reshape(N, C, H, W)
        else:
            # ---- general planes: separable two-pass MXU path ---------------
            band_bytes = 2 * (H * H + W * W) * cds          # double-buffered
            plane_bytes = 4 * H * W * itemsize              # in(x2) + out(x2)
            target = max(1, (usable - band_bytes - (2 << 20)) // max(plane_bytes, 1))
            target = int(min(target, 512))
            B, nc_pad = self._pick_batch(NC, target)

            if nc_pad != NC:
                x = jnp.pad(x, ((0, nc_pad - NC), (0, 0), (0, 0)))
            mh = jnp.asarray(bh, dtype=cdt)                 # out = mh @ x
            mw = jnp.asarray(bw.T, dtype=cdt)               # out = x @ mw

            steps = nc_pad // B
            cost = pl.CostEstimate(
                flops=2 * nc_pad * H * W * (H + W), transcendentals=0,
                bytes_accessed=2 * nc_pad * H * W * itemsize + (H * H + W * W) * cds)

            kern = functools.partial(_separable_kernel, cdt=cdt,
                                     fuse_w=(H % 8 == 0))
            out = pl.pallas_call(
                kern,
                out_shape=jax.ShapeDtypeStruct((nc_pad, H, W), inputs.dtype),
                grid_spec=pltpu.PrefetchScalarGridSpec(
                    num_scalar_prefetch=0,
                    grid=(steps,),
                    in_specs=[
                        pl.BlockSpec((B, H, W), lambda i: (i, 0, 0)),
                        pl.BlockSpec((H, H), lambda i: (0, 0)),
                        pl.BlockSpec((W, W), lambda i: (0, 0)),
                    ],
                    out_specs=pl.BlockSpec((B, H, W), lambda i: (i, 0, 0)),
                ),
                compiler_params=pltpu.CompilerParams(
                    dimension_semantics=("parallel",),
                    vmem_limit_bytes=vmem_limit),
                cost_estimate=cost,
            )(x, mh, mw)
            out = out[:NC].reshape(N, C, H, W)
            # TODO(synk): planes too large for even a single (B=1) VMEM block
            # (or where the dense O(H^2+W^2) bands dominate on v5e) would need
            # an H-tiled band path with a ph-row halo or a kh/kw-tap shift-add
            # fallback; not required at the sizes this module targets.

        # Constant padding with a non-zero fill contributes a separable rank-1
        # term f * (1 - s_h(y) * s_w(x)); added in f32 outside the kernel.
        if mode == "constant" and self.fill_value != 0.0:
            s_h = bh.sum(axis=1)
            s_w = bw.sum(axis=1)
            corr = (self.fill_value * (1.0 - np.outer(s_h, s_w))).astype(np.float32)
            out = (out.astype(jnp.float32) + jnp.asarray(corr)).astype(inputs.dtype)

        return out


# ---------------------------------------------------------------------------
# Demo / smoke test.
# ---------------------------------------------------------------------------
if __name__ == "__main__":
    def reference(x, kh, kw, sh, sw):
        # Pure-JAX reference: reflect-pad then direct 2D correlation (f32).
        ph, pw = kh // 2, kw // 2
        k2d = np.outer(_gaussian_1d_np(kh, sh), _gaussian_1d_np(kw, sw)).astype(np.float32)
        xp = jnp.pad(x, ((0, 0), (0, 0), (ph, ph), (pw, pw)), mode="reflect")
        H, W = x.shape[-2:]
        ref = jnp.zeros_like(x)
        for i in range(kh):
            for j in range(kw):
                ref = ref + k2d[i, j] * xp[:, :, i:i + H, j:j + W]
        return ref

    key = jax.random.PRNGKey(0)
    k1, k2 = jax.random.split(key)

    blur = GaussianBlur2d(kernel_size=(5, 5), sigma=(1.5, 1.5),
                          padding_mode="reflect")

    # Small planes -> lane-dense kron path.
    x1 = jax.random.normal(k1, (2, 4, 16, 16), dtype=jnp.float32)
    y1 = jax.block_until_ready(blur(x1))
    assert y1.shape == x1.shape and y1.dtype == x1.dtype
    r1 = jax.block_until_ready(reference(x1, 5, 5, 1.5, 1.5))
    assert bool(jnp.allclose(y1, r1, atol=2e-2, rtol=2e-2)), "kron path mismatch"

    # Larger planes -> separable two-matmul path.
    x2 = jax.random.normal(k2, (2, 3, 32, 40), dtype=jnp.float32)
    y2 = jax.block_until_ready(blur(x2))
    assert y2.shape == x2.shape and y2.dtype == x2.dtype
    r2 = jax.block_until_ready(reference(x2, 5, 5, 1.5, 1.5))
    assert bool(jnp.allclose(y2, r2, atol=2e-2, rtol=2e-2)), "separable path mismatch"

    print("KERNEL_OK")
</pallas_src>

<mosaic_0001>
module attributes {stable_mosaic.version = 11 : i64} {
  func.func @_kron_kernel(%arg0: i32, %arg1: memref<8x256xf32, #tpu.memory_space<vmem>>, %arg2: memref<256x256xbf16, #tpu.memory_space<vmem>>, %arg3: memref<8x256xf32, #tpu.memory_space<vmem>>) attributes {dimension_semantics = [#tpu.dimension_semantics<parallel>], iteration_bounds = array<i64: 1>, scalar_prefetch = 0 : i64, scratch_operands = 0 : i64, tpu.core_type = #tpu.core_type<tc>, window_params = [{transform_indices = @transform_0, window_bounds = array<i64: 8, 256>}, {pipeline_mode = #tpu.pipeline_mode<synchronous>, transform_indices = @transform_1, window_bounds = array<i64: 256, 256>}, {transform_indices = @transform_2, window_bounds = array<i64: 8, 256>}]} {
    %c0 = arith.constant 0 : index
    %c0_0 = arith.constant 0 : index
    %0 = vector.load %arg1[%c0, %c0_0] : memref<8x256xf32, #tpu.memory_space<vmem>>, vector<8x256xf32>
    %1 = arith.truncf %0 : vector<8x256xf32> to vector<8x256xbf16>
    %c0_1 = arith.constant 0 : index
    %c0_2 = arith.constant 0 : index
    %2 = vector.load %arg2[%c0_1, %c0_2] : memref<256x256xbf16, #tpu.memory_space<vmem>>, vector<256x256xbf16>
    %cst = arith.constant dense<0.000000e+00> : vector<8x256xf32>
    %3 = tpu.matmul %1, %2, %cst {dimension_numbers = #tpu.dot_dimension_numbers<[1], [0], [0], [1], [0, 0, 1, 1], [], []>} : vector<8x256xbf16>, vector<256x256xbf16>, vector<8x256xf32> -> vector<8x256xf32>
    %c0_3 = arith.constant 0 : index
    %c0_4 = arith.constant 0 : index
    %4 = vector.load %arg3[%c0_3, %c0_4] : memref<8x256xf32, #tpu.memory_space<vmem>>, vector<8x256xf32>
    tpu.vector_store %arg3[%c0_3, %c0_4], %3 {strides = array<i32>} : memref<8x256xf32, #tpu.memory_space<vmem>>, vector<8x256xf32>,
    return
  }
  func.func @transform_0(%arg0: i32) -> (i32, i32) {
    %c0_i32 = arith.constant 0 : i32
    %c0_i32_0 = arith.constant 0 : i32
    return %arg0, %c0_i32 : i32, i32
  }
  func.func @transform_1(%arg0: i32) -> (i32, i32) {
    %c0_i32 = arith.constant 0 : i32
    %c0_i32_0 = arith.constant 0 : i32
    %c0_i32_1 = arith.constant 0 : i32
    return %c0_i32, %c0_i32_0 : i32, i32
  }
  func.func @transform_2(%arg0: i32) -> (i32, i32) {
    %c0_i32 = arith.constant 0 : i32
    %c0_i32_0 = arith.constant 0 : i32
    return %arg0, %c0_i32 : i32, i32
  }
}

</mosaic_0001>

<llo_original>
// kernel: tpu_custom_call.1
$region0: #{tpu_custom_call.1}
  #allocation0 [shape = 'u32[]', space=smem, size = 0x4, offset = 0x4, fixed_abs, tag = 'smem constant byte address 0x4 - core index']
  #allocation1 [shape = 'u32[144,128]{1,0:T(1,128)}', space=vmem, size = 0x12000, scoped, tag = 'internal scratch']
  %s0 = inlined_call_operand.hbm [shape: f32[8,256], index: 0, kind: input, shape index: {}]
  %s1 = inlined_call_operand.hbm [shape: bf16[256,256], index: 1, kind: input, shape index: {}]
  %s2 = inlined_call_operand.hbm [shape: f32[8,256], index: 2, kind: output, shape index: {}]
  %s3 = sld [smem:[#allocation0]]
  $region26: #{tpu_custom_call.1} parent=0
    _
  %s5 = ssub.s32 1, %s3
  %s6 = scalar_select 0, %s5, %s3
  $region1: #{tpu_custom_call.1} parent=0
    #allocation2 [shape = 'u8[8192]{0}', space=vmem, size = 0x2000, scoped, tag = 'input window, operand 0, single buffered']
    #allocation3 [shape = 's32[1]{0}', space=sflag, size = 0x4, scoped, tag = 'scoped memory for tpu_custom_call.1']
    #allocation4 [shape = 's32[1]{0}', space=sflag, size = 0x4, scoped, tag = 'scoped memory for tpu_custom_call.1']
    #allocation5 [shape = 'u8[131072]{0}', space=vmem, size = 0x20000, scoped, tag = 'input window, operand 1, single buffered']
    #allocation6 [shape = 's32[1]{0}', space=sflag, size = 0x4, scoped, tag = 'scoped memory for tpu_custom_call.1']
    #allocation7 [shape = 'u8[8192]{0}', space=vmem, size = 0x2000, scoped, tag = 'output window, operand 0, single buffered']
    %7 = vsyncpa [#allocation3], 0
    %8 = vsyncpa [#allocation6], 0
    %9 = vsyncpa [#allocation4], 0
    // Predicated region
    $region2: #{tpu_custom_call.1} parent=1 // pred_check
      _
    $region3: #{tpu_custom_call.1} parent=1 // pred_check_branch
      %11 = sbr.rel (0) target = $region5
    $region4: #{tpu_custom_call.1} parent=1 // pred_region
      %s13 = ssub.s32 256, 256
      %14 = vsyncadd [#allocation3], %s13
      %s16 = sshll.u32 [#allocation2], 4
      %s17 = int_to_ptr.vmem [resolvable:$true] %s16
      %19 = dma.hbm_to_vmem [thread:$0]  %s0, 256, %s17, [#allocation3]
    $region5: #{tpu_custom_call.1} parent=1 // pred_fallthru
      _
    // Predicated region
    $region6: #{tpu_custom_call.1} parent=1 // pred_check
      _
    $region7: #{tpu_custom_call.1} parent=1 // pred_check_branch
      %21 = sbr.rel (0) target = $region9
    $region8: #{tpu_custom_call.1} parent=1 // pred_region
      %s23 = ssub.s32 4096, 4096
      %24 = vsyncadd [#allocation6], %s23
      %s25 = sshll.u32 [#allocation5], 4
      %s26 = int_to_ptr.vmem [resolvable:$true] %s25
      %31 = dma.hbm_to_vmem [thread:$0]  %s1, 4096, %s26, [#allocation6], 128, 128, 8
    $region9: #{tpu_custom_call.1} parent=1 // pred_fallthru
      _
    // Predicated region
    $region10: #{tpu_custom_call.1} parent=1 // pred_check
      _
    $region11: #{tpu_custom_call.1} parent=1 // pred_check_branch
      %33 = sbr.rel (0) target = $region13
    $region12: #{tpu_custom_call.1} parent=1 // pred_region
      %34 = dma.done [#allocation3], 256
    $region13: #{tpu_custom_call.1} parent=1 // pred_fallthru
      _
    // Predicated region
    $region14: #{tpu_custom_call.1} parent=1 // pred_check
      _
    $region15: #{tpu_custom_call.1} parent=1 // pred_check_branch
      %36 = sbr.rel (0) target = $region17
    $region16: #{tpu_custom_call.1} parent=1 // pred_region
      %37 = dma.done [#allocation6], 4096
    $region17: #{tpu_custom_call.1} parent=1 // pred_fallthru
      _
    %v38 = vld [vmem:[#allocation2] sm:$0xff]
    %v39 = vld [vmem:[#allocation2 + $0x8] sm:$0xff]
    %v40 = vpack.c.bf16 %v38, %v38
    %v41 = vpack.c.bf16 %v39, %v39
    %v42 = vld [vmem:[#allocation5] sm:$0xff]
    %v43 = vld [vmem:[#allocation5 + $0x8] sm:$0xff]
    %v44 = vld [vmem:[#allocation5 + $0x10] sm:$0xff]
    %v45 = vld [vmem:[#allocation5 + $0x18] sm:$0xff]
    %v46 = vld [vmem:[#allocation5 + $0x20] sm:$0xff]
    %v47 = vld [vmem:[#allocation5 + $0x28] sm:$0xff]
    %v48 = vld [vmem:[#allocation5 + $0x30] sm:$0xff]
    %v49 = vld [vmem:[#allocation5 + $0x38] sm:$0xff]
    %v50 = vld [vmem:[#allocation5 + $0x40] sm:$0xff]
    %v51 = vld [vmem:[#allocation5 + $0x48] sm:$0xff]
    %v52 = vld [vmem:[#allocation5 + $0x50] sm:$0xff]
    %v53 = vld [vmem:[#allocation5 + $0x58] sm:$0xff]
    %v54 = vld [vmem:[#allocation5 + $0x60] sm:$0xff]
    %v55 = vld [vmem:[#allocation5 + $0x68] sm:$0xff]
    %v56 = vld [vmem:[#allocation5 + $0x70] sm:$0xff]
    %v57 = vld [vmem:[#allocation5 + $0x78] sm:$0xff]
    %v58 = vld [vmem:[#allocation5 + $0x80] sm:$0xff]
    %v59 = vld [vmem:[#allocation5 + $0x88] sm:$0xff]
    %v60 = vld [vmem:[#allocation5 + $0x90] sm:$0xff]
    %v61 = vld [vmem:[#allocation5 + $0x98] sm:$0xff]
    %v62 = vld [vmem:[#allocation5 + $0xa0] sm:$0xff]
    %v63 = vld [vmem:[#allocation5 + $0xa8] sm:$0xff]
    %v64 = vld [vmem:[#allocation5 + $0xb0] sm:$0xff]
    %v65 = vld [vmem:[#allocation5 + $0xb8] sm:$0xff]
    %v66 = vld [vmem:[#allocation5 + $0xc0] sm:$0xff]
    %v67 = vld [vmem:[#allocation5 + $0xc8] sm:$0xff]
    %v68 = vld [vmem:[#allocation5 + $0xd0] sm:$0xff]
    %v69 = vld [vmem:[#allocation5 + $0xd8] sm:$0xff]
    %v70 = vld [vmem:[#allocation5 + $0xe0] sm:$0xff]
    %v71 = vld [vmem:[#allocation5 + $0xe8] sm:$0xff]
    %v72 = vld [vmem:[#allocation5 + $0xf0] sm:$0xff]
    %v73 = vld [vmem:[#allocation5 + $0xf8] sm:$0xff]
    %v106 = vunpack.c.l.b16 %v42
    %v107 = vunpack.c.h.b16 %v42
    %v108 = vunpack.c.l.b16 %v43
    %v109 = vunpack.c.h.b16 %v43
    %v110 = vunpack.c.l.b16 %v44
    %v111 = vunpack.c.h.b16 %v44
    %v112 = vunpack.c.l.b16 %v45
    %v113 = vunpack.c.h.b16 %v45
    %v114 = vunpack.c.l.b16 %v46
    %v115 = vunpack.c.h.b16 %v46
    %v116 = vunpack.c.l.b16 %v47
    %v117 = vunpack.c.h.b16 %v47
    %v118 = vunpack.c.l.b16 %v48
    %v119 = vunpack.c.h.b16 %v48
    %v120 = vunpack.c.l.b16 %v49
    %v121 = vunpack.c.h.b16 %v49
    %v122 = vunpack.c.l.b16 %v50
    %v123 = vunpack.c.h.b16 %v50
    %v124 = vunpack.c.l.b16 %v51
    %v125 = vunpack.c.h.b16 %v51
    %v126 = vunpack.c.l.b16 %v52
    %v127 = vunpack.c.h.b16 %v52
    %v128 = vunpack.c.l.b16 %v53
    %v129 = vunpack.c.h.b16 %v53
    %v130 = vunpack.c.l.b16 %v54
    %v131 = vunpack.c.h.b16 %v54
    %v132 = vunpack.c.l.b16 %v55
    %v133 = vunpack.c.h.b16 %v55
    %v134 = vunpack.c.l.b16 %v56
    %v135 = vunpack.c.h.b16 %v56
    %v136 = vunpack.c.l.b16 %v57
    %v137 = vunpack.c.h.b16 %v57
    %v138 = vunpack.c.l.b16 %v58
    %v139 = vunpack.c.h.b16 %v58
    %v140 = vunpack.c.l.b16 %v59
    %v141 = vunpack.c.h.b16 %v59
    %v142 = vunpack.c.l.b16 %v60
    %v143 = vunpack.c.h.b16 %v60
    %v144 = vunpack.c.l.b16 %v61
    %v145 = vunpack.c.h.b16 %v61
    %v146 = vunpack.c.l.b16 %v62
    %v147 = vunpack.c.h.b16 %v62
    %v148 = vunpack.c.l.b16 %v63
    %v149 = vunpack.c.h.b16 %v63
    %v150 = vunpack.c.l.b16 %v64
    %v151 = vunpack.c.h.b16 %v64
    %v152 = vunpack.c.l.b16 %v65
    %v153 = vunpack.c.h.b16 %v65
    %v154 = vunpack.c.l.b16 %v66
    %v155 = vunpack.c.h.b16 %v66
    %v156 = vunpack.c.l.b16 %v67
    %v157 = vunpack.c.h.b16 %v67
    %v158 = vunpack.c.l.b16 %v68
    %v159 = vunpack.c.h.b16 %v68
    %v160 = vunpack.c.l.b16 %v69
    %v161 = vunpack.c.h.b16 %v69
    %v162 = vunpack.c.l.b16 %v70
    %v163 = vunpack.c.h.b16 %v70
    %v164 = vunpack.c.l.b16 %v71
    %v165 = vunpack.c.h.b16 %v71
    %v166 = vunpack.c.l.b16 %v72
    %v167 = vunpack.c.h.b16 %v72
    %v168 = vunpack.c.l.b16 %v73
    %v169 = vunpack.c.h.b16 %v73
    %v170 = vpack.c.b16 %v108, %v106
    %v171 = vpack.c.b16 %v109, %v107
    %v172 = vpack.c.b16 %v112, %v110
    %v173 = vpack.c.b16 %v113, %v111
    %v174 = vpack.c.b16 %v116, %v114
    %v175 = vpack.c.b16 %v117, %v115
    %v176 = vpack.c.b16 %v120, %v118
    %v177 = vpack.c.b16 %v121, %v119
    %v178 = vpack.c.b16 %v124, %v122
    %v179 = vpack.c.b16 %v125, %v123
    %v180 = vpack.c.b16 %v128, %v126
    %v181 = vpack.c.b16 %v129, %v127
    %v182 = vpack.c.b16 %v132, %v130
    %v183 = vpack.c.b16 %v133, %v131
    %v184 = vpack.c.b16 %v136, %v134
    %v185 = vpack.c.b16 %v137, %v135
    %v186 = vpack.c.b16 %v140, %v138
    %v187 = vpack.c.b16 %v141, %v139
    %v188 = vpack.c.b16 %v144, %v142
    %v189 = vpack.c.b16 %v145, %v143
    %v190 = vpack.c.b16 %v148, %v146
    %v191 = vpack.c.b16 %v149, %v147
    %v192 = vpack.c.b16 %v152, %v150
    %v193 = vpack.c.b16 %v153, %v151
    %v194 = vpack.c.b16 %v156, %v154
    %v195 = vpack.c.b16 %v157, %v155
    %v196 = vpack.c.b16 %v160, %v158
    %v197 = vpack.c.b16 %v161, %v159
    %v198 = vpack.c.b16 %v164, %v162
    %v199 = vpack.c.b16 %v165, %v163
    %v200 = vpack.c.b16 %v168, %v166
    %v201 = vpack.c.b16 %v169, %v167
    %234 = vmatprep.subr.bf16.mxu0 %v185
    %235 = vmatpush1.bf16.msra.mxu0 %v184
    %236 = vmatprep.subr.bf16.mxu0 %v183
    %237 = vmatpush1.bf16.msra.mxu0 %v182
    %238 = vmatprep.subr.bf16.mxu0 %v181
    %239 = vmatpush1.bf16.msra.mxu0 %v180
    %240 = vmatprep.subr.bf16.mxu0 %v179
    %241 = vmatpush1.bf16.msra.mxu0 %v178
    %242 = vmatprep.subr.bf16.mxu0 %v177
    %243 = vmatpush1.bf16.msra.mxu0 %v176
    %244 = vmatprep.subr.bf16.mxu0 %v175
    %245 = vmatpush1.bf16.msra.mxu0 %v174
    %246 = vmatprep.subr.bf16.mxu0 %v173
    %247 = vmatpush1.bf16.msra.mxu0 %v172
    %248 = vmatprep.subr.bf16.mxu0 %v171
    %249 = vmatpush1.bf16.msra.mxu0 %v170
    %250 = vmatprep.subr.bf16.mxu0 %v201
    %251 = vmatpush2.bf16.msra.mxu0 %v200
    %252 = vmatprep.subr.bf16.mxu0 %v199
    %253 = vmatpush2.bf16.msra.mxu0 %v198
    %254 = vmatprep.subr.bf16.mxu0 %v197
    %255 = vmatpush2.bf16.msra.mxu0 %v196
    %256 = vmatprep.subr.bf16.mxu0 %v195
    %257 = vmatpush2.bf16.msra.mxu0 %v194
    %258 = vmatprep.subr.bf16.mxu0 %v193
    %259 = vmatpush2.bf16.msra.mxu0 %v192
    %260 = vmatprep.subr.bf16.mxu0 %v191
    %261 = vmatpush2.bf16.msra.mxu0 %v190
    %262 = vmatprep.subr.bf16.mxu0 %v189
    %263 = vmatpush2.bf16.msra.mxu0 %v188
    %264 = vmatprep.subr.bf16.mxu0 %v187
    %265 = vmatpush2.bf16.msra.mxu0 %v186
    %266 = vmatprep.mubr.bf16.mxu0 %v41
    %267 = vmatmul.mubr.bf16.gmra.mxu0 %v40
    %v268 = vpop.f32.mrf.mxu0
    %v269 = vadd.f32 0.0, %v268
    %v270 = vpop.f32.mrf.mxu0
    %v271 = vadd.f32 0.0, %v270
    %v272 = vpop.f32.mrf.mxu0
    %v273 = vpop.f32.mrf.mxu0
    %274 = vdwg.mxu0
    %275 = vst [vmem:[#allocation7] sm:$0xff] %v269
    %276 = vst [vmem:[#allocation7 + $0x8] sm:$0xff] %v271
    // Predicated region
    $region18: #{tpu_custom_call.1} parent=1 // pred_check
      _
    $region19: #{tpu_custom_call.1} parent=1 // pred_check_branch
      %278 = sbr.rel (0) target = $region21
    $region20: #{tpu_custom_call.1} parent=1 // pred_region
      %s280 = ssub.s32 256, 256
      %281 = vsyncadd [#allocation4], %s280
      %s283 = sshll.u32 [#allocation7], 4
      %s284 = int_to_ptr.vmem [resolvable:$true] %s283
      %286 = dma.vmem_to_hbm [thread:$0]  %s284, 256, %s2, [#allocation4]
    $region21: #{tpu_custom_call.1} parent=1 // pred_fallthru
      _
    // Predicated region
    $region22: #{tpu_custom_call.1} parent=1 // pred_check
      _
    $region23: #{tpu_custom_call.1} parent=1 // pred_check_branch
      %288 = sbr.rel (0) target = $region25
    $region24: #{tpu_custom_call.1} parent=1 // pred_region
      %289 = dma.done [#allocation4], 256
    $region25: #{tpu_custom_call.1} parent=1 // pred_fallthru
      _
    %290 = vsyncpa [#allocation3], 1
    %291 = vsyncpa [#allocation6], 1
    %292 = vsyncpa [#allocation4], 1

</llo_original>
